<compile_context>
chip_gen: v7x
topology: tpu7x:2x2x1
jax: 0.10.0
libtpu: 0.0.40
codegen_flags: <defaults>
</compile_context>

<pallas_src>
import functools

import jax
import jax.numpy as jnp
from jax.experimental import pallas as pl
from jax.experimental.pallas import tpu as pltpu


def _copy_kernel(x_ref, o_ref):
    # x_ref: (TH, W) row-tile of the selected channel (channel dim squeezed by BlockSpec)
    # o_ref: (TH, W) matching tile of the (1, H, W) output
    o_ref[...] = x_ref[...]


def _pick_row_tile(H: int, W: int, itemsize: int, max_block_bytes: int) -> int:
    """Largest row tile (multiple of 8, or full H) whose block fits the byte budget."""
    if H * W * itemsize <= max_block_bytes:
        return H
    rows = (max_block_bytes // (W * itemsize)) // 8 * 8
    rows = max(8, int(rows))
    return min(rows, H)


@functools.partial(jax.jit, static_argnames=("c", "max_block_bytes"))
def get_specific_channel(img: jnp.ndarray, c: int, *, max_block_bytes: int = 4 << 20):
    """Pallas equivalent of Get_specific_channel(c)(img) for a (C, H, W) tensor."""
    C, H, W = img.shape
    assert 0 <= c < C, f"channel index {c} out of range for {C} channels"

    th = _pick_row_tile(H, W, img.dtype.itemsize, max_block_bytes)
    grid = (pl.cdiv(H, th),)

    cost = pl.CostEstimate(
        flops=0,
        transcendentals=0,
        bytes_accessed=2 * H * W * img.dtype.itemsize,
    )

    out = pl.pallas_call(
        _copy_kernel,
        out_shape=jax.ShapeDtypeStruct((1, H, W), img.dtype),
        grid=grid,
        in_specs=[
            # Static channel selection happens here: only channel `c` is ever DMA'd.
            pl.BlockSpec((pl.Squeezed(), th, W), lambda i: (c, i, 0)),
        ],
        out_specs=pl.BlockSpec((pl.Squeezed(), th, W), lambda i: (0, i, 0)),
        compiler_params=pltpu.CompilerParams(dimension_semantics=("parallel",)),
        cost_estimate=cost,
    )(img)
    return out


def get_specific_channel_ref(img: jnp.ndarray, c: int) -> jnp.ndarray:
    """Pure-JAX reference: img[[c], :, :]."""
    return img[c : c + 1, :, :]


if __name__ == "__main__":
    key = jax.random.PRNGKey(0)

    # Small shape consistent with the module's forward: img is (C, H, W).
    C, H, W = 4, 16, 16
    c = 2
    img = jax.random.uniform(key, (C, H, W), dtype=jnp.float32)

    out = get_specific_channel(img, c)
    out = jax.block_until_ready(out)

    ref = get_specific_channel_ref(img, c)
    assert out.shape == (1, H, W), out.shape
    assert out.dtype == img.dtype
    assert jnp.array_equal(out, ref), "single-block path mismatch"

    # Exercise the row-tiled (grid > 1) pipelined path with a tiny block budget.
    key2 = jax.random.PRNGKey(1)
    C2, H2, W2 = 3, 64, 128
    c2 = 1
    img2 = jax.random.uniform(key2, (C2, H2, W2), dtype=jnp.float32)
    out2 = get_specific_channel(img2, c2, max_block_bytes=8192)  # -> 16-row tiles, grid=(4,)
    out2 = jax.block_until_ready(out2)
    ref2 = get_specific_channel_ref(img2, c2)
    assert out2.shape == (1, H2, W2), out2.shape
    assert jnp.array_equal(out2, ref2), "tiled path mismatch"

    print("KERNEL_OK")
</pallas_src>

<mosaic_0001>
module attributes {stable_mosaic.version = 11 : i64} {
  func.func @_copy_kernel(%arg0: i32, %arg1: memref<1x16x16xf32, #tpu.memory_space<vmem>>, %arg2: memref<1x16x16xf32, #tpu.memory_space<vmem>>) attributes {dimension_semantics = [#tpu.dimension_semantics<parallel>], iteration_bounds = array<i64: 1>, scalar_prefetch = 0 : i64, scratch_operands = 0 : i64, tpu.core_type = #tpu.core_type<tc>, window_params = [{transform_indices = @transform_0, window_bounds = array<i64: 1, 16, 16>}, {transform_indices = @transform_1, window_bounds = array<i64: 1, 16, 16>}]} {
    %c0 = arith.constant 0 : index
    %c0_0 = arith.constant 0 : index
    %c0_1 = arith.constant 0 : index
    %0 = vector.load %arg1[%c0, %c0_0, %c0_1] : memref<1x16x16xf32, #tpu.memory_space<vmem>>, vector<1x16x16xf32>
    %1 = vector.shape_cast %0 : vector<1x16x16xf32> to vector<16x16xf32>
    %c0_2 = arith.constant 0 : index
    %c0_3 = arith.constant 0 : index
    %c0_4 = arith.constant 0 : index
    %2 = vector.load %arg2[%c0_2, %c0_3, %c0_4] : memref<1x16x16xf32, #tpu.memory_space<vmem>>, vector<1x16x16xf32>
    %3 = vector.shape_cast %2 : vector<1x16x16xf32> to vector<16x16xf32>
    %4 = vector.shape_cast %1 : vector<16x16xf32> to vector<1x16x16xf32>
    tpu.vector_store %arg2[%c0_2, %c0_3, %c0_4], %4 {strides = array<i32>} : memref<1x16x16xf32, #tpu.memory_space<vmem>>, vector<1x16x16xf32>,
    return
  }
  func.func @transform_0(%arg0: i32) -> (i32, i32, i32) {
    %c2_i32 = arith.constant 2 : i32
    %c0_i32 = arith.constant 0 : i32
    %c0_i32_0 = arith.constant 0 : i32
    return %c2_i32, %arg0, %c0_i32 : i32, i32, i32
  }
  func.func @transform_1(%arg0: i32) -> (i32, i32, i32) {
    %c0_i32 = arith.constant 0 : i32
    %c0_i32_0 = arith.constant 0 : i32
    %c0_i32_1 = arith.constant 0 : i32
    return %c0_i32, %arg0, %c0_i32_0 : i32, i32, i32
  }
}

</mosaic_0001>

<llo_original>
// kernel: get_specific_channel.1
$region0: #{get_specific_channel.1}
  #allocation0 [shape = 'u32[]', space=smem, size = 0x4, offset = 0x4, fixed_abs, tag = 'smem constant byte address 0x4 - core index']
  #allocation1 [shape = 'u32[144,128]{1,0:T(1,128)}', space=vmem, size = 0x12000, scoped, tag = 'internal scratch']
  %s0 = inlined_call_operand.hbm [shape: f32[4,16,16], index: 0, kind: input, shape index: {}]
  %s1 = inlined_call_operand.hbm [shape: f32[1,16,16], index: 1, kind: output, shape index: {}]
  %s2 = sld [smem:[#allocation0]]
  $region18: #{get_specific_channel.1} parent=0
    _
  %s4 = ssub.s32 1, %s2
  %s5 = scalar_select 0, %s4, %s2
  $region1: #{get_specific_channel.1} parent=0
    #allocation2 [shape = 'u8[8192]{0}', space=vmem, size = 0x2000, scoped, tag = 'input window, operand 0, single buffered']
    #allocation3 [shape = 's32[1]{0}', space=sflag, size = 0x4, scoped, tag = 'scoped memory for get_specific_channel.1']
    #allocation4 [shape = 's32[1]{0}', space=sflag, size = 0x4, scoped, tag = 'scoped memory for get_specific_channel.1']
    #allocation5 [shape = 'u8[8192]{0}', space=vmem, size = 0x2000, scoped, tag = 'output window, operand 0, single buffered']
    %6 = vsyncpa [#allocation3], 0
    %7 = vsyncpa [#allocation4], 0
    // Predicated region
    $region2: #{get_specific_channel.1} parent=1 // pred_check
      _
    $region3: #{get_specific_channel.1} parent=1 // pred_check_branch
      %9 = sbr.rel (0) target = $region5
    $region4: #{get_specific_channel.1} parent=1 // pred_region
      %s11 = ssub.s32 256, 256
      %12 = vsyncadd [#allocation3], %s11
      %s13 = scalar_lea.hbm %s0, 512
      %s14 = sshll.u32 [#allocation2], 4
      %s15 = int_to_ptr.vmem [resolvable:$true] %s14
      %20 = dma.hbm_to_vmem [thread:$0]  %s13, 256, %s15, [#allocation3], 128, 128, 8
    $region5: #{get_specific_channel.1} parent=1 // pred_fallthru
      _
    // Predicated region
    $region6: #{get_specific_channel.1} parent=1 // pred_check
      _
    $region7: #{get_specific_channel.1} parent=1 // pred_check_branch
      %22 = sbr.rel (0) target = $region9
    $region8: #{get_specific_channel.1} parent=1 // pred_region
      %23 = dma.done [#allocation3], 256
    $region9: #{get_specific_channel.1} parent=1 // pred_fallthru
      _
    %v24 = vld [vmem:[#allocation2] sm:$0xff]
    %v25 = vld [vmem:[#allocation2 + $0x8] sm:$0xff]
    %vm26 = vcmask 130048
    %27 = vst.msk [vmem:[#allocation5] sm:$0xff] %vm26, %v24
    %28 = vst.msk [vmem:[#allocation5 + $0x8] sm:$0xff] %vm26, %v25
    // Predicated region
    $region10: #{get_specific_channel.1} parent=1 // pred_check
      _
    $region11: #{get_specific_channel.1} parent=1 // pred_check_branch
      %30 = sbr.rel (0) target = $region13
    $region12: #{get_specific_channel.1} parent=1 // pred_region
      %s32 = ssub.s32 256, 256
      %33 = vsyncadd [#allocation4], %s32
      %s34 = sshll.u32 [#allocation5], 4
      %s35 = int_to_ptr.vmem [resolvable:$true] %s34
      %40 = dma.vmem_to_hbm [thread:$0]  %s35, 256, %s1, [#allocation4], 128, 128, 8
    $region13: #{get_specific_channel.1} parent=1 // pred_fallthru
      _
    // Predicated region
    $region14: #{get_specific_channel.1} parent=1 // pred_check
      _
    $region15: #{get_specific_channel.1} parent=1 // pred_check_branch
      %42 = sbr.rel (0) target = $region17
    $region16: #{get_specific_channel.1} parent=1 // pred_region
      %43 = dma.done [#allocation4], 256
    $region17: #{get_specific_channel.1} parent=1 // pred_fallthru
      _
    %44 = vsyncpa [#allocation3], 1
    %45 = vsyncpa [#allocation4], 1

</llo_original>
